<compile_context>
chip_gen: v5e
topology: v5e:2x2
jax: 0.10.0
libtpu: 0.0.40
codegen_flags: <defaults>
</compile_context>

<pallas_src>
import jax
import jax.numpy as jnp
from jax import lax
from jax.experimental import pallas as pl
from jax.experimental.pallas import tpu as pltpu


def _round_up(x, m):
    return (x + m - 1) // m * m


def _svd_linear_kernel(x_ref, w_ref, b_ref, xa_ref, lb_ref, o_ref):
    # x:  (tm, K)  compute dtype (bf16)
    # w:  (tn, K)  compute dtype      -- native (out, in) layout, NT matmul
    # b:  (1, tn)  f32
    # xa: (tm, r)  f32                -- precomputed x @ ((A*E)*scale).T
    # lb: (tn, r)  f32                -- native lora_B layout, NT matmul
    nt = (((1,), (1,)), ((), ()))
    base = lax.dot_general(x_ref[...], w_ref[...], nt,
                           preferred_element_type=jnp.float32)     # (tm, tn)
    lora = lax.dot_general(xa_ref[...], lb_ref[...], nt,
                           preferred_element_type=jnp.float32)     # (tm, tn)
    o_ref[...] = (base + lora + b_ref[...]).astype(o_ref.dtype)


def prepare_svd_linear_base(weight, bias=None, *, compute_dtype=jnp.bfloat16,
                            n_align=256):
    """One-time prep of the frozen base-layer params (W has requires_grad=False in
    AdaLoRA). Pads out_features to a multiple of `n_align` (full 256-wide MXU on
    v6e/v7x) and casts to the compute dtype. Cache the result across forward calls
    so the full W is not re-read / re-written in HBM every step."""
    N, K = weight.shape
    N_pad = _round_up(max(N, n_align), n_align)
    w = weight
    b = bias if bias is not None else jnp.zeros((N,), jnp.float32)
    if N_pad != N:
        w = jnp.pad(w, ((0, N_pad - N), (0, 0)))
        b = jnp.pad(b, (0, N_pad - N))
    return {
        "weight": w.astype(compute_dtype),                      # (N_pad, K)
        "bias2d": b.reshape(1, N_pad).astype(jnp.float32),      # (1, N_pad)
        "out_features": N,
        "padded_out_features": N_pad,
        "in_features": K,
        "compute_dtype": compute_dtype,
    }


def svd_linear_forward(x, base, lora_A, lora_B, lora_E, scaling, ranknum,
                       *, tm_target=384, tn=256, out_dtype=None):
    """x: [..., in_features] -> [..., out_features]. `base` from prepare_svd_linear_base."""
    compute_dtype = base["compute_dtype"]
    N = base["out_features"]
    N_pad = base["padded_out_features"]
    K = base["in_features"]
    out_dt = x.dtype if out_dtype is None else out_dtype

    orig_shape = x.shape
    x2d = x.reshape(-1, K)
    M = x2d.shape[0]
    r = lora_A.shape[0]

    # Fold scaling / (ranknum + 1e-5) into (A*E); jnp ops so traced scalars work.
    scale = jnp.asarray(scaling, jnp.float32) / (jnp.asarray(ranknum, jnp.float32) + 1e-5)
    if r == 0:
        xa = jnp.zeros((M, 1), jnp.float32)
        lb = jnp.zeros((N_pad, 1), jnp.float32)
        r = 1
    else:
        ae = (lora_A.astype(jnp.float32) * lora_E.astype(jnp.float32)) * scale   # (r, K)
        # TODO(synk): lora_dropout > 0.0 would apply dropout to x here (LoRA path only).
        xa = jnp.dot(x2d.astype(jnp.float32), ae.T,
                     preferred_element_type=jnp.float32)                          # (M, r)
        lb = lora_B.astype(jnp.float32)
        if N_pad != N:
            lb = jnp.pad(lb, ((0, N_pad - N), (0, 0)))                            # (N_pad, r)

    bytes_c = jnp.dtype(compute_dtype).itemsize
    bytes_o = jnp.dtype(out_dt).itemsize

    # ---- tile selection -------------------------------------------------------
    tn = min(tn, N_pad)
    if tn % 128 or N_pad % tn:
        tn = 256 if N_pad % 256 == 0 else 128

    r_lanes = _round_up(r, 128)          # r dim is lane-padded inside VMEM
    # Double-buffered per-step VMEM footprint kept under ~40 MiB (fits v7x's 64 MiB;
    # v5e/v6e have 128 MiB so this is conservative there).
    budget = 40 << 20
    fixed = 2 * (tn * K * bytes_c + tn * r_lanes * 4) + 2 * tn * 4
    per_row = 2 * (K * bytes_c + r_lanes * 4) + 2 * tn * bytes_o
    tm_cap = max((budget - fixed) // per_row, 16)
    tm = max(16, (min(tm_target, tm_cap) // 16) * 16)
    if M <= tm:
        tm = _round_up(M, 16)            # small / ragged M: avoid padded-row compute
    M_pad = _round_up(M, tm)

    num_m, num_n = M_pad // tm, N_pad // tn
    # v7x has two TensorCores: make sure a trivially small grid still has >= 2 tiles.
    if num_m == 1 and num_n == 1 and tn % 256 == 0:
        tn, num_n = tn // 2, 2

    # ---- pad & cast operands --------------------------------------------------
    if M_pad != M:
        x2d = jnp.pad(x2d, ((0, M_pad - M), (0, 0)))
        xa = jnp.pad(xa, ((0, M_pad - M), (0, 0)))
    x_c = x2d.astype(compute_dtype)
    xa_c = xa.astype(jnp.float32)
    lb_c = lb.astype(jnp.float32)

    # ---- grid ordering: keep resident the operand whose re-stream is cheaper ---
    stream_w = (num_m - 1) * N_pad * K   # x-resident (N innermost): W re-fetched per row tile
    stream_x = (num_n - 1) * M_pad * K   # W-resident (M innermost): x re-fetched per col tile
    if stream_x < stream_w:
        grid = (num_n, num_m)
        x_map, w_map = (lambda j, i: (i, 0)), (lambda j, i: (j, 0))
        b_map, xa_map = (lambda j, i: (0, j)), (lambda j, i: (i, 0))
        lb_map, o_map = (lambda j, i: (j, 0)), (lambda j, i: (i, j))
    else:
        grid = (num_m, num_n)
        x_map, w_map = (lambda i, j: (i, 0)), (lambda i, j: (j, 0))
        b_map, xa_map = (lambda i, j: (0, j)), (lambda i, j: (i, 0))
        lb_map, o_map = (lambda i, j: (j, 0)), (lambda i, j: (i, j))

    # VMEM limit derived from the actual footprint (always well below v7x's 64 MiB).
    est = (2 * (tm * K + tn * K) * bytes_c
           + 2 * (tm * r_lanes + tn * r_lanes) * 4
           + 2 * tn * 4 + 2 * tm * tn * bytes_o)
    vmem_limit = int(min(56 << 20, max(24 << 20, est * 5 // 4 + (4 << 20))))

    out = pl.pallas_call(
        _svd_linear_kernel,
        out_shape=jax.ShapeDtypeStruct((M_pad, N_pad), out_dt),
        grid_spec=pltpu.PrefetchScalarGridSpec(
            num_scalar_prefetch=0,
            grid=grid,
            in_specs=[
                pl.BlockSpec((tm, K), x_map),     # x tile
                pl.BlockSpec((tn, K), w_map),     # W tile (native (out, in))
                pl.BlockSpec((1, tn), b_map),     # bias tile
                pl.BlockSpec((tm, r), xa_map),    # x @ ((A*E)*scale).T tile
                pl.BlockSpec((tn, r), lb_map),    # lora_B tile (native (out, r))
            ],
            out_specs=pl.BlockSpec((tm, tn), o_map),
        ),
        compiler_params=pltpu.CompilerParams(
            dimension_semantics=("parallel", "parallel"),
            vmem_limit_bytes=vmem_limit,
        ),
    )(x_c, base["weight"], base["bias2d"], xa_c, lb_c)

    out = out[:M, :N]
    return out.reshape(*orig_shape[:-1], N)


if __name__ == "__main__":
    # Small shapes consistent with an nn.Linear base layer; M=144 and
    # out_features=384 deliberately exercise the ragged-M and N-padding paths.
    batch, seq = 2, 72
    in_features, out_features, r = 256, 384, 8
    lora_alpha = 1          # scaling = lora_alpha (since > 0)
    ranknum = float(r)      # ranknum.data.fill_(float(r))

    key = jax.random.PRNGKey(0)
    kx, kw, kb, ka, kbb, ke = jax.random.split(key, 6)

    x = jax.random.normal(kx, (batch, seq, in_features), dtype=jnp.float32)
    weight = jax.random.normal(kw, (out_features, in_features), dtype=jnp.float32) * 0.02
    bias = jax.random.normal(kb, (out_features,), dtype=jnp.float32) * 0.02

    # AdaLoRA params. reset_lora_parameters zeros lora_E; nonzero values are used
    # here so the LoRA path actually contributes (deterministic init).
    lora_A = jax.random.normal(ka, (r, in_features), dtype=jnp.float32) * 0.02
    lora_B = jax.random.normal(kbb, (out_features, r), dtype=jnp.float32) * 0.02
    lora_E = jax.random.normal(ke, (r, 1), dtype=jnp.float32)

    # One-time prep of the frozen base weight (cache this across forward calls).
    base = prepare_svd_linear_base(weight, bias)

    out = svd_linear_forward(x, base, lora_A, lora_B, lora_E,
                             scaling=lora_alpha, ranknum=ranknum)
    out = jax.block_until_ready(out)

    # Pure-JAX f32 reference of the exact forward semantics (kernel runs bf16 base
    # operands with f32 accumulation, so tolerance is bf16-level).
    x2 = x.astype(jnp.float32)
    ref = x2 @ weight.T + bias
    ref = ref + (x2 @ (lora_A * lora_E).T @ lora_B.T) * lora_alpha / (ranknum + 1e-5)

    assert out.shape == (batch, seq, out_features)
    assert jnp.allclose(out, ref, atol=2e-2, rtol=2e-2), (
        float(jnp.max(jnp.abs(out - ref))))

    print("KERNEL_OK")
</pallas_src>

<mosaic_0001>
module attributes {stable_mosaic.version = 11 : i64} {
  func.func @_svd_linear_kernel(%arg0: i32, %arg1: i32, %arg2: memref<144x256xbf16, #tpu.memory_space<vmem>>, %arg3: memref<256x256xbf16, #tpu.memory_space<vmem>>, %arg4: memref<1x256xf32, #tpu.memory_space<vmem>>, %arg5: memref<144x8xf32, #tpu.memory_space<vmem>>, %arg6: memref<256x8xf32, #tpu.memory_space<vmem>>, %arg7: memref<144x256xf32, #tpu.memory_space<vmem>>) attributes {dimension_semantics = [#tpu.dimension_semantics<parallel>, #tpu.dimension_semantics<parallel>], iteration_bounds = array<i64: 1, 2>, scalar_prefetch = 0 : i64, scratch_operands = 0 : i64, tpu.core_type = #tpu.core_type<tc>, window_params = [{transform_indices = @transform_0, window_bounds = array<i64: 144, 256>}, {transform_indices = @transform_1, window_bounds = array<i64: 256, 256>}, {transform_indices = @transform_2, window_bounds = array<i64: 1, 256>}, {transform_indices = @transform_3, window_bounds = array<i64: 144, 8>}, {transform_indices = @transform_4, window_bounds = array<i64: 256, 8>}, {transform_indices = @transform_5, window_bounds = array<i64: 144, 256>}]} {
    %c0 = arith.constant 0 : index
    %c0_0 = arith.constant 0 : index
    %0 = vector.load %arg2[%c0, %c0_0] : memref<144x256xbf16, #tpu.memory_space<vmem>>, vector<144x256xbf16>
    %c0_1 = arith.constant 0 : index
    %c0_2 = arith.constant 0 : index
    %1 = vector.load %arg3[%c0_1, %c0_2] : memref<256x256xbf16, #tpu.memory_space<vmem>>, vector<256x256xbf16>
    %cst = arith.constant dense<0.000000e+00> : vector<144x256xf32>
    %2 = tpu.matmul %0, %1, %cst {dimension_numbers = #tpu.dot_dimension_numbers<[1], [1], [0], [0], [0, 0, 1, 0], [], []>} : vector<144x256xbf16>, vector<256x256xbf16>, vector<144x256xf32> -> vector<144x256xf32>
    %c0_3 = arith.constant 0 : index
    %c0_4 = arith.constant 0 : index
    %3 = vector.load %arg5[%c0_3, %c0_4] : memref<144x8xf32, #tpu.memory_space<vmem>>, vector<144x8xf32>
    %c0_5 = arith.constant 0 : index
    %c0_6 = arith.constant 0 : index
    %4 = vector.load %arg6[%c0_5, %c0_6] : memref<256x8xf32, #tpu.memory_space<vmem>>, vector<256x8xf32>
    %cst_7 = arith.constant dense<0.000000e+00> : vector<144x256xf32>
    %5 = tpu.matmul %3, %4, %cst_7 {dimension_numbers = #tpu.dot_dimension_numbers<[1], [1], [0], [0], [0, 0, 1, 0], [], []>} : vector<144x8xf32>, vector<256x8xf32>, vector<144x256xf32> -> vector<144x256xf32>
    %6 = arith.addf %2, %5 : vector<144x256xf32>
    %c0_8 = arith.constant 0 : index
    %c0_9 = arith.constant 0 : index
    %7 = vector.load %arg4[%c0_8, %c0_9] : memref<1x256xf32, #tpu.memory_space<vmem>>, vector<1x256xf32>
    %8 = vector.broadcast %7 : vector<1x256xf32> to vector<144x256xf32>
    %9 = arith.addf %6, %8 : vector<144x256xf32>
    %c0_10 = arith.constant 0 : index
    %c0_11 = arith.constant 0 : index
    %10 = vector.load %arg7[%c0_10, %c0_11] : memref<144x256xf32, #tpu.memory_space<vmem>>, vector<144x256xf32>
    tpu.vector_store %arg7[%c0_10, %c0_11], %9 {strides = array<i32>} : memref<144x256xf32, #tpu.memory_space<vmem>>, vector<144x256xf32>,
    return
  }
  func.func @transform_0(%arg0: i32, %arg1: i32) -> (i32, i32) {
    %c0_i32 = arith.constant 0 : i32
    %c0_i32_0 = arith.constant 0 : i32
    return %arg0, %c0_i32 : i32, i32
  }
  func.func @transform_1(%arg0: i32, %arg1: i32) -> (i32, i32) {
    %c0_i32 = arith.constant 0 : i32
    %c0_i32_0 = arith.constant 0 : i32
    return %arg1, %c0_i32 : i32, i32
  }
  func.func @transform_2(%arg0: i32, %arg1: i32) -> (i32, i32) {
    %c0_i32 = arith.constant 0 : i32
    %c0_i32_0 = arith.constant 0 : i32
    return %c0_i32, %arg1 : i32, i32
  }
  func.func @transform_3(%arg0: i32, %arg1: i32) -> (i32, i32) {
    %c0_i32 = arith.constant 0 : i32
    %c0_i32_0 = arith.constant 0 : i32
    return %arg0, %c0_i32 : i32, i32
  }
  func.func @transform_4(%arg0: i32, %arg1: i32) -> (i32, i32) {
    %c0_i32 = arith.constant 0 : i32
    %c0_i32_0 = arith.constant 0 : i32
    return %arg1, %c0_i32 : i32, i32
  }
  func.func @transform_5(%arg0: i32, %arg1: i32) -> (i32, i32) {
    %c0_i32 = arith.constant 0 : i32
    return %arg0, %arg1 : i32, i32
  }
}

</mosaic_0001>

<llo_original>
// kernel: tpu_custom_call.1
$region0: #{tpu_custom_call.1}
  #allocation0 [shape = 'u32[]', space=smem, size = 0x4, offset = 0x4, fixed_abs, tag = 'smem constant byte address 0x4 - core index']
  #allocation1 [shape = 'u32[72,128]{1,0:T(1,128)}', space=vmem, size = 0x9000, scoped, tag = 'internal scratch']
  %s0 = inlined_call_operand.vmem [shape: bf16[144,256], index: 0, kind: input, shape index: {}]
  %s1 = inlined_call_operand.vmem [shape: bf16[512,256], index: 1, kind: input, shape index: {}]
  %s2 = inlined_call_operand.vmem [shape: f32[1,512], index: 2, kind: input, shape index: {}]
  %s3 = inlined_call_operand.vmem [shape: f32[144,8], index: 3, kind: input, shape index: {}]
  %s4 = inlined_call_operand.vmem [shape: f32[512,8], index: 4, kind: input, shape index: {}]
  %s5 = inlined_call_operand.hbm [shape: f32[144,512], index: 5, kind: output, shape index: {}]
  %s6 = sld [smem:[#allocation0]]
  $region53: #{tpu_custom_call.1} parent=0
    _
  %s8 = ssub.s32 1, %s6
  %s9 = scalar_select 0, %s8, %s6
  $region1: #{tpu_custom_call.1} parent=0
    #allocation2 [shape = 'u8[294912]{0}', space=vmem, size = 0x48000, scoped, tag = 'output window, operand 0']
    #allocation3 [shape = 's32[2]{0}', space=sflag, size = 0x8, scoped, tag = 'scoped memory for tpu_custom_call.1']
    %10 = vsyncpa [#allocation3], 0
    %s11 = scalar_lea.sflag [#allocation3], 1
    %12 = vsyncpa %s11, 0
    loop: start=0, step=1, limit=4
    $region2: #{tpu_custom_call.1} parent=1 // loop_pre_header
      _
    $region3: #{tpu_custom_call.1} parent=1 // loop_header
      %s14 = sphi 0, %s18
      %p15 = scmp.ge.s32.totalorder %s14, 4
      %s21 = sphi 0, %s33
      %s22 = sphi 0, %s29
      %s23 = sphi 0, %s21
      %s24 = sphi 0, %s22
      %s25 = sphi 0, %s23
      %s26 = sphi 0, %s24
      %s36 = sphi 0, %s38
      %s39 = sphi 0, %s36
      %s40 = sphi 0, %s39
      %s56 = sphi 0, %s40
      %s62 = sphi 0, %s64
      %s65 = sphi 0, %s62
      %s66 = sphi 0, %s65
      %s82 = sphi 0, %s66
      %s88 = sphi 0, %s90
      %s91 = sphi 0, %s88
      %s92 = sphi 0, %s91
      %s108 = sphi 0, %s92
      %s114 = sphi 0, %s116
      %s117 = sphi 0, %s114
      %s118 = sphi 0, %s117
      %s134 = sphi 0, %s118
      %s140 = sphi 0, %s142
      %s143 = sphi 0, %s140
      %s144 = sphi 0, %s143
      %s160 = sphi 0, %s144
      %s168 = sphi 0, %s170
      %s171 = sphi 0, %s168
      %s172 = sphi 0, %s171
      %s188 = sphi 0, %s172
    $region4: #{tpu_custom_call.1} parent=1 // loop_header_branch
      %17 = sbr.rel (%p15) target = $region8
    $region5: #{tpu_custom_call.1} parent=1 // loop_body
      %s19 = ssub.s32 %s14, 1
      %s20 = ssub.s32 %s14, 2
      %s27 = sadd.s32 1, %s22
      %p28 = scmp.ge.s32.totalorder %s27, 2
      %s29 = scalar_select %p28, 0, %s27
      %s30 = sadd.s32 1, %s21
      %s31 = scalar_select %p28, %s30, %s21
      %p32 = scmp.ge.s32.totalorder %s31, 1
      %s33 = scalar_select %p32, 0, %s31
      %s34 = ssub.s32 %s21, %s33
      %p35 = scmp.eq.s32.totalorder %s34, 0
      %s37 = sadd.s32 %s36, 1
      %s38 = scalar_select %p35, %s36, %s37
      %p41 = pneg %p35
      %p42 = scmp.eq.s32.totalorder %s14, 1
      %p43 = por %p41, %p42
      %p44 = scmp.ne.s32.totalorder %s36, %s39
      %p45 = scmp.eq.s32.totalorder %s14, 0
      %p46 = por %p44, %p45
      %p47 = scmp.ne.s32.totalorder %s36, %s39
      %p48 = scmp.eq.s32.totalorder %s19, 1
      %p49 = por %p47, %p48
      %p50 = scmp.ne.s32.totalorder %s39, %s40
      %p51 = scmp.eq.s32.totalorder %s19, 0
      %p52 = por %p50, %p51
      %p53 = scmp.ne.s32.totalorder %s39, %s40
      %p54 = scmp.eq.s32.totalorder %s20, 1
      %p55 = por %p53, %p54
      %p57 = scmp.ne.s32.totalorder %s40, %s56
      %p58 = scmp.eq.s32.totalorder %s20, 0
      %p59 = por %p57, %p58
      %s60 = ssub.s32 %s22, %s29
      %p61 = scmp.eq.s32.totalorder %s60, 0
      %s63 = sadd.s32 %s62, 1
      %s64 = scalar_select %p61, %s62, %s63
      %p67 = pneg %p61
      %p68 = scmp.eq.s32.totalorder %s14, 1
      %p69 = por %p67, %p68
      %p70 = scmp.ne.s32.totalorder %s62, %s65
      %p71 = scmp.eq.s32.totalorder %s14, 0
      %p72 = por %p70, %p71
      %p73 = scmp.ne.s32.totalorder %s62, %s65
      %p74 = scmp.eq.s32.totalorder %s19, 1
      %p75 = por %p73, %p74
      %p76 = scmp.ne.s32.totalorder %s65, %s66
      %p77 = scmp.eq.s32.totalorder %s19, 0
      %p78 = por %p76, %p77
      %p79 = scmp.ne.s32.totalorder %s65, %s66
      %p80 = scmp.eq.s32.totalorder %s20, 1
      %p81 = por %p79, %p80
      %p83 = scmp.ne.s32.totalorder %s66, %s82
      %p84 = scmp.eq.s32.totalorder %s20, 0
      %p85 = por %p83, %p84
      %s86 = ssub.s32 %s22, %s29
      %p87 = scmp.eq.s32.totalorder %s86, 0
      %s89 = sadd.s32 %s88, 1
      %s90 = scalar_select %p87, %s88, %s89
      %p93 = pneg %p87
      %p94 = scmp.eq.s32.totalorder %s14, 1
      %p95 = por %p93, %p94
      %p96 = scmp.ne.s32.totalorder %s88, %s91
      %p97 = scmp.eq.s32.totalorder %s14, 0
      %p98 = por %p96, %p97
      %p99 = scmp.ne.s32.totalorder %s88, %s91
      %p100 = scmp.eq.s32.totalorder %s19, 1
      %p101 = por %p99, %p100
      %p102 = scmp.ne.s32.totalorder %s91, %s92
      %p103 = scmp.eq.s32.totalorder %s19, 0
      %p104 = por %p102, %p103
      %p105 = scmp.ne.s32.totalorder %s91, %s92
      %p106 = scmp.eq.s32.totalorder %s20, 1
      %p107 = por %p105, %p106
      %p109 = scmp.ne.s32.totalorder %s92, %s108
      %p110 = scmp.eq.s32.totalorder %s20, 0
      %p111 = por %p109, %p110
      %s112 = ssub.s32 %s21, %s33
      %p113 = scmp.eq.s32.totalorder %s112, 0
      %s115 = sadd.s32 %s114, 1
      %s116 = scalar_select %p113, %s114, %s115
      %p119 = pneg %p113
      %p120 = scmp.eq.s32.totalorder %s14, 1
      %p121 = por %p119, %p120
      %p122 = scmp.ne.s32.totalorder %s114, %s117
      %p123 = scmp.eq.s32.totalorder %s14, 0
      %p124 = por %p122, %p123
      %p125 = scmp.ne.s32.totalorder %s114, %s117
      %p126 = scmp.eq.s32.totalorder %s19, 1
      %p127 = por %p125, %p126
      %p128 = scmp.ne.s32.totalorder %s117, %s118
      %p129 = scmp.eq.s32.totalorder %s19, 0
      %p130 = por %p128, %p129
      %p131 = scmp.ne.s32.totalorder %s117, %s118
      %p132 = scmp.eq.s32.totalorder %s20, 1
      %p133 = por %p131, %p132
      %p135 = scmp.ne.s32.totalorder %s118, %s134
      %p136 = scmp.eq.s32.totalorder %s20, 0
      %p137 = por %p135, %p136
      %s138 = ssub.s32 %s22, %s29
      %p139 = scmp.eq.s32.totalorder %s138, 0
      %s141 = sadd.s32 %s140, 1
      %s142 = scalar_select %p139, %s140, %s141
      %p145 = pneg %p139
      %p146 = scmp.eq.s32.totalorder %s14, 1
      %p147 = por %p145, %p146
      %p148 = scmp.ne.s32.totalorder %s140, %s143
      %p149 = scmp.eq.s32.totalorder %s14, 0
      %p150 = por %p148, %p149
      %p151 = scmp.ne.s32.totalorder %s140, %s143
      %p152 = scmp.eq.s32.totalorder %s19, 1
      %p153 = por %p151, %p152
      %p154 = scmp.ne.s32.totalorder %s143, %s144
      %p155 = scmp.eq.s32.totalorder %s19, 0
      %p156 = por %p154, %p155
      %p157 = scmp.ne.s32.totalorder %s143, %s144
      %p158 = scmp.eq.s32.totalorder %s20, 1
      %p159 = por %p157, %p158
      %p161 = scmp.ne.s32.totalorder %s144, %s160
      %p162 = scmp.eq.s32.totalorder %s20, 0
      %p163 = por %p161, %p162
      %s164 = ssub.s32 %s21, %s33
      %s165 = ssub.s32 %s22, %s29
      %s166 = sor.u32 %s164, %s165
      %p167 = scmp.eq.s32.totalorder %s166, 0
      %s169 = sadd.s32 %s168, 1
      %s170 = scalar_select %p167, %s168, %s169
      %p173 = pneg %p167
      %p174 = scmp.eq.s32.totalorder %s14, 1
      %p175 = por %p173, %p174
      %p176 = scmp.ne.s32.totalorder %s168, %s171
      %p177 = scmp.eq.s32.totalorder %s14, 0
      %p178 = por %p176, %p177
      %p179 = scmp.ne.s32.totalorder %s168, %s171
      %p180 = scmp.eq.s32.totalorder %s19, 1
      %p181 = por %p179, %p180
      %p182 = scmp.ne.s32.totalorder %s171, %s172
      %p183 = scmp.eq.s32.totalorder %s19, 0
      %p184 = por %p182, %p183
      %p185 = scmp.ne.s32.totalorder %s171, %s172
      %p186 = scmp.eq.s32.totalorder %s20, 1
      %p187 = por %p185, %p186
      %p189 = scmp.ne.s32.totalorder %s172, %s188
      %p190 = scmp.eq.s32.totalorder %s20, 0
      %p191 = por %p189, %p190
      %p192 = scmp.le.s32.totalorder 1, %s14
      %p193 = scmp.lt.s32.totalorder %s14, 3
      %p194 = pnand %p192, %p193
      %p195 = pneg %p194
      // Predicated region
      $region9: #{tpu_custom_call.1} parent=5 // pred_check
        _
      $region10: #{tpu_custom_call.1} parent=5 // pred_check_branch
        %197 = sbr.rel (%p194) target = $region12
      $region11: #{tpu_custom_call.1} parent=5 // pred_region
        %s198 = ssub.s32 %s14, 1
        // Predicated region
        $region13: #{tpu_custom_call.1} parent=11 // pred_check
          %p199 = pneg %p52
        $region14: #{tpu_custom_call.1} parent=11 // pred_check_branch
          %201 = sbr.rel (%p199) target = $region16
        $region15: #{tpu_custom_call.1} parent=11 // pred_region
          %s202 = smul.u32 18, %s23
          %p203 = scmp.lt.s32.totalorder %s202, 17
          %s204 = scalar_select %p203, %s202, 17
          %s205 = smul.addr %s204, 2
          %s206 = smul.addr %s205, 4
          %s207 = scalar_lea.vmem %s0, %s206
          %s208 = smul.u32 18, %s23
        $region16: #{tpu_custom_call.1} parent=11 // pred_fallthru
          _
        // Predicated region
        $region17: #{tpu_custom_call.1} parent=11 // pred_check
          %p209 = pneg %p130
        $region18: #{tpu_custom_call.1} parent=11 // pred_check_branch
          %211 = sbr.rel (%p209) target = $region20
        $region19: #{tpu_custom_call.1} parent=11 // pred_region
          %s212 = smul.u32 18, %s23
          %p213 = scmp.lt.s32.totalorder %s212, 17
          %s214 = scalar_select %p213, %s212, 17
          %s215 = smul.addr %s214, 8
          %s216 = scalar_lea.vmem %s3, %s215
          %s217 = smul.u32 18, %s23
        $region20: #{tpu_custom_call.1} parent=11 // pred_fallthru
          _
      $region12: #{tpu_custom_call.1} parent=5 // pred_fallthru
        _
      %p218 = scmp.lt.s32.totalorder %s14, 2
      // Predicated region
      $region21: #{tpu_custom_call.1} parent=5 // pred_check
        %p219 = pneg %p218
      $region22: #{tpu_custom_call.1} parent=5 // pred_check_branch
        %221 = sbr.rel (%p219) target = $region24
      $region23: #{tpu_custom_call.1} parent=5 // pred_region
        // Predicated region
        $region25: #{tpu_custom_call.1} parent=23 // pred_check
          %p222 = pneg %p72
        $region26: #{tpu_custom_call.1} parent=23 // pred_check_branch
          %224 = sbr.rel (%p222) target = $region28
        $region27: #{tpu_custom_call.1} parent=23 // pred_region
          %s225 = smul.u32 32, %s22
          %p226 = scmp.lt.s32.totalorder %s225, 63
          %s227 = scalar_select %p226, %s225, 63
          %s228 = smul.addr %s227, 2
          %s229 = smul.addr %s228, 4
          %s230 = scalar_lea.vmem %s1, %s229
          %s231 = smul.u32 32, %s22
        $region28: #{tpu_custom_call.1} parent=23 // pred_fallthru
          _
        // Predicated region
        $region29: #{tpu_custom_call.1} parent=23 // pred_check
          %p232 = pneg %p98
        $region30: #{tpu_custom_call.1} parent=23 // pred_check_branch
          %234 = sbr.rel (%p232) target = $region32
        $region31: #{tpu_custom_call.1} parent=23 // pred_region
          %s235 = smul.u32 2, %s22
          %p236 = scmp.lt.s32.totalorder %s235, 3
          %s237 = scalar_select %p236, %s235, 3
          %s238 = scalar_lea.vmem %s2, %s237
          %s239 = smul.u32 2, %s22
        $region32: #{tpu_custom_call.1} parent=23 // pred_fallthru
          _
        // Predicated region
        $region33: #{tpu_custom_call.1} parent=23 // pred_check
          %p240 = pneg %p150
        $region34: #{tpu_custom_call.1} parent=23 // pred_check_branch
          %242 = sbr.rel (%p240) target = $region36
        $region35: #{tpu_custom_call.1} parent=23 // pred_region
          %s243 = smul.u32 32, %s22
          %p244 = scmp.lt.s32.totalorder %s243, 63
          %s245 = scalar_select %p244, %s243, 63
          %s246 = smul.addr %s245, 8
          %s247 = scalar_lea.vmem %s4, %s246
          %s248 = smul.u32 32, %s22
        $region36: #{tpu_custom_call.1} parent=23 // pred_fallthru
          _
      $region24: #{tpu_custom_call.1} parent=5 // pred_fallthru
        _
      %p249 = scmp.le.s32.totalorder 1, %s14
      %p250 = scmp.lt.s32.totalorder %s14, 3
      %p251 = pnand %p249, %p250
      %p252 = pneg %p251
      // Predicated region
      $region37: #{tpu_custom_call.1} parent=5 // pred_check
        _
      $region38: #{tpu_custom_call.1} parent=5 // pred_check_branch
        %254 = sbr.rel (%p251) target = $region40
      $region39: #{tpu_custom_call.1} parent=5 // pred_region
        %s255 = ssub.s32 %s14, 1
        %s256 = smul.u32 18, %s23
        %p257 = scmp.lt.s32.totalorder %s256, 17
        %s258 = scalar_select %p257, %s256, 17
        %s259 = smul.addr %s258, 2
        %s260 = smul.addr %s259, 4
        %s261 = scalar_lea.vmem %s0, %s260
        %p262 = pneg %p52
        %p263 = pneg %p49
        %s264 = smul.u32 32, %s24
        %p265 = scmp.lt.s32.totalorder %s264, 63
        %s266 = scalar_select %p265, %s264, 63
        %s267 = smul.addr %s266, 2
        %s268 = smul.addr %s267, 4
        %s269 = scalar_lea.vmem %s1, %s268
        %p270 = pneg %p78
        %p271 = pneg %p75
        %s272 = smul.u32 2, %s24
        %p273 = scmp.lt.s32.totalorder %s272, 3
        %s274 = scalar_select %p273, %s272, 3
        %s275 = scalar_lea.vmem %s2, %s274
        %p276 = pneg %p104
        %p277 = pneg %p101
        %s278 = smul.u32 18, %s23
        %p279 = scmp.lt.s32.totalorder %s278, 17
        %s280 = scalar_select %p279, %s278, 17
        %s281 = smul.addr %s280, 8
        %s282 = scalar_lea.vmem %s3, %s281
        %p283 = pneg %p130
        %p284 = pneg %p127
        %s285 = smul.u32 32, %s24
        %p286 = scmp.lt.s32.totalorder %s285, 63
        %s287 = scalar_select %p286, %s285, 63
        %s288 = smul.addr %s287, 8
        %s289 = scalar_lea.vmem %s4, %s288
        %p290 = pneg %p156
        %p291 = pneg %p153
        %p292 = pneg %p184
        %p293 = pneg %p181
        %s294 = sand.u32 %s171, 1
        %s295 = scalar_lea.sflag [#allocation3], %s294
        %s296 = sand.u32 %s171, 1
        %s297 = smul.addr %s296, 288
        %s298 = scalar_lea.vmem [#allocation2], %s297
        %s299 = smul.u32 18, %s23
        %p300 = scmp.lt.s32.totalorder %s299, 17
        %s301 = scalar_select %p300, %s299, 17
        %s302 = smul.addr %s301, 2
        %s303 = smul.addr %s302, 4
        %s304 = scalar_lea.vmem %s0, %s303
        %s305 = smul.u32 18, %s23
        %s306 = smul.u32 32, %s24
        %p307 = scmp.lt.s32.totalorder %s306, 63
        %s308 = scalar_select %p307, %s306, 63
        %s309 = smul.addr %s308, 2
        %s310 = smul.addr %s309, 4
        %s311 = scalar_lea.vmem %s1, %s310
        %s312 = smul.u32 32, %s24
        %s313 = smul.u32 2, %s24
        %p314 = scmp.lt.s32.totalorder %s313, 3
        %s315 = scalar_select %p314, %s313, 3
        %s316 = scalar_lea.vmem %s2, %s315
        %s317 = smul.u32 2, %s24
        %s318 = smul.u32 18, %s23
        %p319 = scmp.lt.s32.totalorder %s318, 17
        %s320 = scalar_select %p319, %s318, 17
        %s321 = smul.addr %s320, 8
        %s322 = scalar_lea.vmem %s3, %s321
        %s323 = smul.u32 18, %s23
        %s324 = smul.u32 32, %s24
        %p325 = scmp.lt.s32.totalorder %s324, 63
        %s326 = scalar_select %p325, %s324, 63
        %s327 = smul.addr %s326, 8
        %s328 = scalar_lea.vmem %s4, %s327
        %s329 = smul.u32 32, %s24
        %s330 = smul.u32 18, %s23
        %s331 = smul.u32 2, %s24
        %v332 = vld [vmem:[%s304] sm:$0xff]
        %v333 = vld [vmem:[%s304 + $0x8] sm:$0xff]
        %v334 = vld [vmem:[%s304 + $0x10] sm:$0xff]
        %v335 = vld [vmem:[%s304 + $0x18] sm:$0xff]
        %v336 = vld [vmem:[%s304 + $0x20] sm:$0xff]
        %v337 = vld [vmem:[%s304 + $0x28] sm:$0xff]
        %v338 = vld [vmem:[%s304 + $0x30] sm:$0xff]
        %v339 = vld [vmem:[%s304 + $0x38] sm:$0xff]
        %v340 = vld [vmem:[%s304 + $0x40] sm:$0xff]
        %v341 = vld [vmem:[%s304 + $0x48] sm:$0xff]
        %v342 = vld [vmem:[%s304 + $0x50] sm:$0xff]
        %v343 = vld [vmem:[%s304 + $0x58] sm:$0xff]
        %v344 = vld [vmem:[%s304 + $0x60] sm:$0xff]
        %v345 = vld [vmem:[%s304 + $0x68] sm:$0xff]
        %v346 = vld [vmem:[%s304 + $0x70] sm:$0xff]
        %v347 = vld [vmem:[%s304 + $0x78] sm:$0xff]
        %v348 = vld [vmem:[%s304 + $0x80] sm:$0xff]
        %v349 = vld [vmem:[%s304 + $0x88] sm:$0xff]
        %v350 = vld [vmem:[%s311] sm:$0xff]
        %v351 = vld [vmem:[%s311 + $0x8] sm:$0xff]
        %v352 = vld [vmem:[%s311 + $0x10] sm:$0xff]
        %v353 = vld [vmem:[%s311 + $0x18] sm:$0xff]
        %v354 = vld [vmem:[%s311 + $0x20] sm:$0xff]
        %v355 = vld [vmem:[%s311 + $0x28] sm:$0xff]
        %v356 = vld [vmem:[%s311 + $0x30] sm:$0xff]
        %v357 = vld [vmem:[%s311 + $0x38] sm:$0xff]
        %v358 = vld [vmem:[%s311 + $0x40] sm:$0xff]
        %v359 = vld [vmem:[%s311 + $0x48] sm:$0xff]
        %v360 = vld [vmem:[%s311 + $0x50] sm:$0xff]
        %v361 = vld [vmem:[%s311 + $0x58] sm:$0xff]
        %v362 = vld [vmem:[%s311 + $0x60] sm:$0xff]
        %v363 = vld [vmem:[%s311 + $0x68] sm:$0xff]
        %v364 = vld [vmem:[%s311 + $0x70] sm:$0xff]
        %v365 = vld [vmem:[%s311 + $0x78] sm:$0xff]
        %v366 = vld [vmem:[%s311 + $0x80] sm:$0xff]
        %v367 = vld [vmem:[%s311 + $0x88] sm:$0xff]
        %v368 = vld [vmem:[%s311 + $0x90] sm:$0xff]
        %v369 = vld [vmem:[%s311 + $0x98] sm:$0xff]
        %v370 = vld [vmem:[%s311 + $0xa0] sm:$0xff]
        %v371 = vld [vmem:[%s311 + $0xa8] sm:$0xff]
        %v372 = vld [vmem:[%s311 + $0xb0] sm:$0xff]
        %v373 = vld [vmem:[%s311 + $0xb8] sm:$0xff]
        %v374 = vld [vmem:[%s311 + $0xc0] sm:$0xff]
        %v375 = vld [vmem:[%s311 + $0xc8] sm:$0xff]
        %v376 = vld [vmem:[%s311 + $0xd0] sm:$0xff]
        %v377 = vld [vmem:[%s311 + $0xd8] sm:$0xff]
        %v378 = vld [vmem:[%s311 + $0xe0] sm:$0xff]
        %v379 = vld [vmem:[%s311 + $0xe8] sm:$0xff]
        %v380 = vld [vmem:[%s311 + $0xf0] sm:$0xff]
        %v381 = vld [vmem:[%s311 + $0xf8] sm:$0xff]
        %v382 = vld [vmem:[%s322] sm:$0xff]
        %v383 = vld [vmem:[%s322 + $0x8] sm:$0xff]
        %v384 = vld [vmem:[%s322 + $0x10] sm:$0xff]
        %v385 = vld [vmem:[%s322 + $0x18] sm:$0xff]
        %v386 = vld [vmem:[%s322 + $0x20] sm:$0xff]
        %v387 = vld [vmem:[%s322 + $0x28] sm:$0xff]
        %v388 = vld [vmem:[%s322 + $0x30] sm:$0xff]
        %v389 = vld [vmem:[%s322 + $0x38] sm:$0xff]
        %v390 = vld [vmem:[%s322 + $0x40] sm:$0xff]
        %v391 = vld [vmem:[%s322 + $0x48] sm:$0xff]
        %v392 = vld [vmem:[%s322 + $0x50] sm:$0xff]
        %v393 = vld [vmem:[%s322 + $0x58] sm:$0xff]
        %v394 = vld [vmem:[%s322 + $0x60] sm:$0xff]
        %v395 = vld [vmem:[%s322 + $0x68] sm:$0xff]
        %v396 = vld [vmem:[%s322 + $0x70] sm:$0xff]
        %v397 = vld [vmem:[%s322 + $0x78] sm:$0xff]
        %v398 = vld [vmem:[%s322 + $0x80] sm:$0xff]
        %v399 = vld [vmem:[%s322 + $0x88] sm:$0xff]
        %v400 = vld [vmem:[%s328] sm:$0xff]
        %v401 = vld [vmem:[%s328 + $0x8] sm:$0xff]
        %v402 = vld [vmem:[%s328 + $0x10] sm:$0xff]
        %v403 = vld [vmem:[%s328 + $0x18] sm:$0xff]
        %v404 = vld [vmem:[%s328 + $0x20] sm:$0xff]
        %v405 = vld [vmem:[%s328 + $0x28] sm:$0xff]
        %v406 = vld [vmem:[%s328 + $0x30] sm:$0xff]
        %v407 = vld [vmem:[%s328 + $0x38] sm:$0xff]
        %v408 = vld [vmem:[%s328 + $0x40] sm:$0xff]
        %v409 = vld [vmem:[%s328 + $0x48] sm:$0xff]
        %v410 = vld [vmem:[%s328 + $0x50] sm:$0xff]
        %v411 = vld [vmem:[%s328 + $0x58] sm:$0xff]
        %v412 = vld [vmem:[%s328 + $0x60] sm:$0xff]
        %v413 = vld [vmem:[%s328 + $0x68] sm:$0xff]
        %v414 = vld [vmem:[%s328 + $0x70] sm:$0xff]
        %v415 = vld [vmem:[%s328 + $0x78] sm:$0xff]
        %v416 = vld [vmem:[%s328 + $0x80] sm:$0xff]
        %v417 = vld [vmem:[%s328 + $0x88] sm:$0xff]
        %v418 = vld [vmem:[%s328 + $0x90] sm:$0xff]
        %v419 = vld [vmem:[%s328 + $0x98] sm:$0xff]
        %v420 = vld [vmem:[%s328 + $0xa0] sm:$0xff]
        %v421 = vld [vmem:[%s328 + $0xa8] sm:$0xff]
        %v422 = vld [vmem:[%s328 + $0xb0] sm:$0xff]
        %v423 = vld [vmem:[%s328 + $0xb8] sm:$0xff]
        %v424 = vld [vmem:[%s328 + $0xc0] sm:$0xff]
        %v425 = vld [vmem:[%s328 + $0xc8] sm:$0xff]
        %v426 = vld [vmem:[%s328 + $0xd0] sm:$0xff]
        %v427 = vld [vmem:[%s328 + $0xd8] sm:$0xff]
        %v428 = vld [vmem:[%s328 + $0xe0] sm:$0xff]
        %v429 = vld [vmem:[%s328 + $0xe8] sm:$0xff]
        %v430 = vld [vmem:[%s328 + $0xf0] sm:$0xff]
        %v431 = vld [vmem:[%s328 + $0xf8] sm:$0xff]
        %vm432 = vcmask 64512
        %v434 = vsel %vm432, %v382, 0
        %v437 = vsel %vm432, %v383, 0
        %v440 = vsel %vm432, %v384, 0
        %v443 = vsel %vm432, %v385, 0
        %v446 = vsel %vm432, %v386, 0
        %v449 = vsel %vm432, %v387, 0
        %v452 = vsel %vm432, %v388, 0
        %v455 = vsel %vm432, %v389, 0
        %v458 = vsel %vm432, %v390, 0
        %v461 = vsel %vm432, %v391, 0
        %v464 = vsel %vm432, %v392, 0
        %v467 = vsel %vm432, %v393, 0
        %v470 = vsel %vm432, %v394, 0
        %v473 = vsel %vm432, %v395, 0
        %v476 = vsel %vm432, %v396, 0
        %v479 = vsel %vm432, %v397, 0
        %v482 = vsel %vm432, %v398, 0
        %v485 = vsel %vm432, %v399, 0
        %v488 = vsel %vm432, %v400, 0
        %v491 = vsel %vm432, %v401, 0
        %v494 = vsel %vm432, %v402, 0
        %v497 = vsel %vm432, %v403, 0
        %v500 = vsel %vm432, %v404, 0
        %v503 = vsel %vm432, %v405, 0
        %v506 = vsel %vm432, %v406, 0
        %v509 = vsel %vm432, %v407, 0
        %v512 = vsel %vm432, %v408, 0
        %v515 = vsel %vm432, %v409, 0
        %v518 = vsel %vm432, %v410, 0
        %v521 = vsel %vm432, %v411, 0
        %v524 = vsel %vm432, %v412, 0
        %v527 = vsel %vm432, %v413, 0
        %v530 = vsel %vm432, %v414, 0
        %v533 = vsel %vm432, %v415, 0
        %v536 = vsel %vm432, %v416, 0
        %v539 = vsel %vm432, %v417, 0
        %v542 = vsel %vm432, %v418, 0
        %v545 = vsel %vm432, %v419, 0
        %v548 = vsel %vm432, %v420, 0
        %v551 = vsel %vm432, %v421, 0
        %v554 = vsel %vm432, %v422, 0
        %v557 = vsel %vm432, %v423, 0
        %v560 = vsel %vm432, %v424, 0
        %v563 = vsel %vm432, %v425, 0
        %v566 = vsel %vm432, %v426, 0
        %v569 = vsel %vm432, %v427, 0
        %v572 = vsel %vm432, %v428, 0
        %v575 = vsel %vm432, %v429, 0
        %v578 = vsel %vm432, %v430, 0
        %v581 = vsel %vm432, %v431, 0
        %583 = vmatpush.xpose.msra.mxu0 %v533
        %584 = vmatpush.xpose.msra.mxu0 %v530
        %585 = vmatpush.xpose.msra.mxu0 %v527
        %586 = vmatpush.xpose.msra.mxu0 %v524
        %587 = vmatpush.xpose.msra.mxu0 %v521
        %588 = vmatpush.xpose.msra.mxu0 %v518
        %589 = vmatpush.xpose.msra.mxu0 %v515
        %590 = vmatpush.xpose.msra.mxu0 %v512
        %591 = vmatpush.xpose.msra.mxu0 %v509
        %592 = vmatpush.xpose.msra.mxu0 %v506
        %593 = vmatpush.xpose.msra.mxu0 %v503
        %594 = vmatpush.xpose.msra.mxu0 %v500
        %595 = vmatpush.xpose.msra.mxu0 %v497
        %596 = vmatpush.xpose.msra.mxu0 %v494
        %597 = vmatpush.xpose.msra.mxu0 %v491
        %598 = vmatpush.xpose.msra.mxu0 %v488
        %599 = vmatmul.f32.gmra.mxu0 %v434
        %v600 = vpop.f32.mrf.mxu0
        %v601 = vadd.f32 0.0, %v600
        %602 = vmatmul.f32.gmra.mxu0 %v437
        %v603 = vpop.f32.mrf.mxu0
        %v604 = vadd.f32 0.0, %v603
        %605 = vmatmul.f32.gmra.mxu0 %v440
        %v606 = vpop.f32.mrf.mxu0
        %v607 = vadd.f32 0.0, %v606
        %608 = vmatmul.f32.gmra.mxu0 %v443
        %v609 = vpop.f32.mrf.mxu0
        %v610 = vadd.f32 0.0, %v609
        %611 = vmatmul.f32.gmra.mxu0 %v446
        %v612 = vpop.f32.mrf.mxu0
        %v613 = vadd.f32 0.0, %v612
        %614 = vmatmul.f32.gmra.mxu0 %v449
        %v615 = vpop.f32.mrf.mxu0
        %v616 = vadd.f32 0.0, %v615
        %617 = vmatmul.f32.gmra.mxu0 %v452
        %v618 = vpop.f32.mrf.mxu0
        %v619 = vadd.f32 0.0, %v618
        %620 = vmatmul.f32.gmra.mxu0 %v455
        %v621 = vpop.f32.mrf.mxu0
        %v622 = vadd.f32 0.0, %v621
        %623 = vmatmul.f32.gmra.mxu0 %v458
        %v624 = vpop.f32.mrf.mxu0
        %v625 = vadd.f32 0.0, %v624
        %626 = vmatmul.f32.gmra.mxu0 %v461
        %v627 = vpop.f32.mrf.mxu0
        %v628 = vadd.f32 0.0, %v627
        %629 = vmatmul.f32.gmra.mxu0 %v464
        %v630 = vpop.f32.mrf.mxu0
        %v631 = vadd.f32 0.0, %v630
        %632 = vmatmul.f32.gmra.mxu0 %v467
        %v633 = vpop.f32.mrf.mxu0
        %v634 = vadd.f32 0.0, %v633
        %635 = vmatmul.f32.gmra.mxu0 %v470
        %v636 = vpop.f32.mrf.mxu0
        %v637 = vadd.f32 0.0, %v636
        %638 = vmatmul.f32.gmra.mxu0 %v473
        %v639 = vpop.f32.mrf.mxu0
        %v640 = vadd.f32 0.0, %v639
        %641 = vmatmul.f32.gmra.mxu0 %v476
        %v642 = vpop.f32.mrf.mxu0
        %v643 = vadd.f32 0.0, %v642
        %644 = vmatmul.f32.gmra.mxu0 %v479
        %v645 = vpop.f32.mrf.mxu0
        %v646 = vadd.f32 0.0, %v645
        %647 = vmatmul.f32.gmra.mxu0 %v482
        %v648 = vpop.f32.mrf.mxu0
        %v649 = vadd.f32 0.0, %v648
        %650 = vmatmul.f32.gmra.mxu0 %v485
        %v651 = vpop.f32.mrf.mxu0
        %v652 = vadd.f32 0.0, %v651
        %653 = vdwg.mxu0
        %654 = vmatpush.xpose.msra.mxu0 %v581
        %655 = vmatpush.xpose.msra.mxu0 %v578
        %656 = vmatpush.xpose.msra.mxu0 %v575
        %657 = vmatpush.xpose.msra.mxu0 %v572
        %658 = vmatpush.xpose.msra.mxu0 %v569
        %659 = vmatpush.xpose.msra.mxu0 %v566
        %660 = vmatpush.xpose.msra.mxu0 %v563
        %661 = vmatpush.xpose.msra.mxu0 %v560
        %662 = vmatpush.xpose.msra.mxu0 %v557
        %663 = vmatpush.xpose.msra.mxu0 %v554
        %664 = vmatpush.xpose.msra.mxu0 %v551
        %665 = vmatpush.xpose.msra.mxu0 %v548
        %666 = vmatpush.xpose.msra.mxu0 %v545
        %667 = vmatpush.xpose.msra.mxu0 %v542
        %668 = vmatpush.xpose.msra.mxu0 %v539
        %669 = vmatpush.xpose.msra.mxu0 %v536
        %670 = vmatmul.f32.gmra.mxu0 %v434
        %v671 = vpop.f32.mrf.mxu0
        %v672 = vadd.f32 0.0, %v671
        %673 = vmatmul.f32.gmra.mxu0 %v437
        %v674 = vpop.f32.mrf.mxu0
        %v675 = vadd.f32 0.0, %v674
        %676 = vmatmul.f32.gmra.mxu0 %v440
        %v677 = vpop.f32.mrf.mxu0
        %v678 = vadd.f32 0.0, %v677
        %679 = vmatmul.f32.gmra.mxu0 %v443
        %v680 = vpop.f32.mrf.mxu0
        %v681 = vadd.f32 0.0, %v680
        %682 = vmatmul.f32.gmra.mxu0 %v446
        %v683 = vpop.f32.mrf.mxu0
        %v684 = vadd.f32 0.0, %v683
        %685 = vmatmul.f32.gmra.mxu0 %v449
        %v686 = vpop.f32.mrf.mxu0
        %v687 = vadd.f32 0.0, %v686
        %688 = vmatmul.f32.gmra.mxu0 %v452
        %v689 = vpop.f32.mrf.mxu0
        %v690 = vadd.f32 0.0, %v689
        %691 = vmatmul.f32.gmra.mxu0 %v455
        %v692 = vpop.f32.mrf.mxu0
        %v693 = vadd.f32 0.0, %v692
        %694 = vmatmul.f32.gmra.mxu0 %v458
        %v695 = vpop.f32.mrf.mxu0
        %v696 = vadd.f32 0.0, %v695
        %697 = vmatmul.f32.gmra.mxu0 %v461
        %v698 = vpop.f32.mrf.mxu0
        %v699 = vadd.f32 0.0, %v698
        %700 = vmatmul.f32.gmra.mxu0 %v464
        %v701 = vpop.f32.mrf.mxu0
        %v702 = vadd.f32 0.0, %v701
        %703 = vmatmul.f32.gmra.mxu0 %v467
        %v704 = vpop.f32.mrf.mxu0
        %v705 = vadd.f32 0.0, %v704
        %706 = vmatmul.f32.gmra.mxu0 %v470
        %v707 = vpop.f32.mrf.mxu0
        %v708 = vadd.f32 0.0, %v707
        %709 = vmatmul.f32.gmra.mxu0 %v473
        %v710 = vpop.f32.mrf.mxu0
        %v711 = vadd.f32 0.0, %v710
        %712 = vmatmul.f32.gmra.mxu0 %v476
        %v713 = vpop.f32.mrf.mxu0
        %v714 = vadd.f32 0.0, %v713
        %715 = vmatmul.f32.gmra.mxu0 %v479
        %v716 = vpop.f32.mrf.mxu0
        %v717 = vadd.f32 0.0, %v716
        %718 = vmatmul.f32.gmra.mxu0 %v482
        %v719 = vpop.f32.mrf.mxu0
        %v720 = vadd.f32 0.0, %v719
        %721 = vmatmul.f32.gmra.mxu0 %v485
        %v722 = vpop.f32.mrf.mxu0
        %v723 = vadd.f32 0.0, %v722
        %724 = vdwg.mxu0
        %v743 = vunpack.c.l.b16 %v332
        %v744 = vunpack.c.h.b16 %v332
        %v745 = vunpack.c.l.b16 %v333
        %v746 = vunpack.c.h.b16 %v333
        %v747 = vunpack.c.l.b16 %v334
        %v748 = vunpack.c.h.b16 %v334
        %v749 = vunpack.c.l.b16 %v335
        %v750 = vunpack.c.h.b16 %v335
        %v751 = vunpack.c.l.b16 %v336
        %v752 = vunpack.c.h.b16 %v336
        %v753 = vunpack.c.l.b16 %v337
        %v754 = vunpack.c.h.b16 %v337
        %v755 = vunpack.c.l.b16 %v338
        %v756 = vunpack.c.h.b16 %v338
        %v757 = vunpack.c.l.b16 %v339
        %v758 = vunpack.c.h.b16 %v339
        %v759 = vunpack.c.l.b16 %v340
        %v760 = vunpack.c.h.b16 %v340
        %v761 = vunpack.c.l.b16 %v341
        %v762 = vunpack.c.h.b16 %v341
        %v763 = vunpack.c.l.b16 %v342
        %v764 = vunpack.c.h.b16 %v342
        %v765 = vunpack.c.l.b16 %v343
        %v766 = vunpack.c.h.b16 %v343
        %v767 = vunpack.c.l.b16 %v344
        %v768 = vunpack.c.h.b16 %v344
        %v769 = vunpack.c.l.b16 %v345
        %v770 = vunpack.c.h.b16 %v345
        %v771 = vunpack.c.l.b16 %v346
        %v772 = vunpack.c.h.b16 %v346
        %v773 = vunpack.c.l.b16 %v347
        %v774 = vunpack.c.h.b16 %v347
        %v775 = vunpack.c.l.b16 %v348
        %v776 = vunpack.c.h.b16 %v348
        %v777 = vunpack.c.l.b16 %v349
        %v778 = vunpack.c.h.b16 %v349
        %v779 = vpack.c.b16 %v745, %v743
        %v780 = vpack.c.b16 %v746, %v744
        %v781 = vpack.c.b16 %v749, %v747
        %v782 = vpack.c.b16 %v750, %v748
        %v783 = vpack.c.b16 %v753, %v751
        %v784 = vpack.c.b16 %v754, %v752
        %v785 = vpack.c.b16 %v757, %v755
        %v786 = vpack.c.b16 %v758, %v756
        %v787 = vpack.c.b16 %v761, %v759
        %v788 = vpack.c.b16 %v762, %v760
        %v789 = vpack.c.b16 %v765, %v763
        %v790 = vpack.c.b16 %v766, %v764
        %v791 = vpack.c.b16 %v769, %v767
        %v792 = vpack.c.b16 %v770, %v768
        %v793 = vpack.c.b16 %v773, %v771
        %v794 = vpack.c.b16 %v774, %v772
        %v795 = vpack.c.b16 %v777, %v775
        %v796 = vpack.c.b16 %v778, %v776
        %v847 = vunpack.c.l.b16 %v350
        %v848 = vunpack.c.h.b16 %v350
        %v849 = vunpack.c.l.b16 %v351
        %v850 = vunpack.c.h.b16 %v351
        %v851 = vunpack.c.l.b16 %v352
        %v852 = vunpack.c.h.b16 %v352
        %v853 = vunpack.c.l.b16 %v353
        %v854 = vunpack.c.h.b16 %v353
        %v855 = vunpack.c.l.b16 %v354
        %v856 = vunpack.c.h.b16 %v354
        %v857 = vunpack.c.l.b16 %v355
        %v858 = vunpack.c.h.b16 %v355
        %v859 = vunpack.c.l.b16 %v356
        %v860 = vunpack.c.h.b16 %v356
        %v861 = vunpack.c.l.b16 %v357
        %v862 = vunpack.c.h.b16 %v357
        %v863 = vunpack.c.l.b16 %v358
        %v864 = vunpack.c.h.b16 %v358
        %v865 = vunpack.c.l.b16 %v359
        %v866 = vunpack.c.h.b16 %v359
        %v867 = vunpack.c.l.b16 %v360
        %v868 = vunpack.c.h.b16 %v360
        %v869 = vunpack.c.l.b16 %v361
        %v870 = vunpack.c.h.b16 %v361
        %v871 = vunpack.c.l.b16 %v362
        %v872 = vunpack.c.h.b16 %v362
        %v873 = vunpack.c.l.b16 %v363
        %v874 = vunpack.c.h.b16 %v363
        %v875 = vunpack.c.l.b16 %v364
        %v876 = vunpack.c.h.b16 %v364
        %v877 = vunpack.c.l.b16 %v365
        %v878 = vunpack.c.h.b16 %v365
        %v879 = vunpack.c.l.b16 %v366
        %v880 = vunpack.c.h.b16 %v366
        %v881 = vunpack.c.l.b16 %v367
        %v882 = vunpack.c.h.b16 %v367
        %v883 = vunpack.c.l.b16 %v368
        %v884 = vunpack.c.h.b16 %v368
        %v885 = vunpack.c.l.b16 %v369
        %v886 = vunpack.c.h.b16 %v369
        %v887 = vunpack.c.l.b16 %v370
        %v888 = vunpack.c.h.b16 %v370
        %v889 = vunpack.c.l.b16 %v371
        %v890 = vunpack.c.h.b16 %v371
        %v891 = vunpack.c.l.b16 %v372
        %v892 = vunpack.c.h.b16 %v372
        %v893 = vunpack.c.l.b16 %v373
        %v894 = vunpack.c.h.b16 %v373
        %v895 = vunpack.c.l.b16 %v374
        %v896 = vunpack.c.h.b16 %v374
        %v897 = vunpack.c.l.b16 %v375
        %v898 = vunpack.c.h.b16 %v375
        %v899 = vunpack.c.l.b16 %v376
        %v900 = vunpack.c.h.b16 %v376
        %v901 = vunpack.c.l.b16 %v377
        %v902 = vunpack.c.h.b16 %v377
        %v903 = vunpack.c.l.b16 %v378
        %v904 = vunpack.c.h.b16 %v378
        %v905 = vunpack.c.l.b16 %v379
        %v906 = vunpack.c.h.b16 %v379
        %v907 = vunpack.c.l.b16 %v380
        %v908 = vunpack.c.h.b16 %v380
        %v909 = vunpack.c.l.b16 %v381
        %v910 = vunpack.c.h.b16 %v381
        %v911 = vpack.c.b16 %v849, %v847
        %v912 = vpack.c.b16 %v850, %v848
        %v913 = vpack.c.b16 %v853, %v851
        %v914 = vpack.c.b16 %v854, %v852
        %v915 = vpack.c.b16 %v857, %v855
        %v916 = vpack.c.b16 %v858, %v856
        %v917 = vpack.c.b16 %v861, %v859
        %v918 = vpack.c.b16 %v862, %v860
        %v919 = vpack.c.b16 %v865, %v863
        %v920 = vpack.c.b16 %v866, %v864
        %v921 = vpack.c.b16 %v869, %v867
        %v922 = vpack.c.b16 %v870, %v868
        %v923 = vpack.c.b16 %v873, %v871
        %v924 = vpack.c.b16 %v874, %v872
        %v925 = vpack.c.b16 %v877, %v875
        %v926 = vpack.c.b16 %v878, %v876
        %v927 = vpack.c.b16 %v881, %v879
        %v928 = vpack.c.b16 %v882, %v880
        %v929 = vpack.c.b16 %v885, %v883
        %v930 = vpack.c.b16 %v886, %v884
        %v931 = vpack.c.b16 %v889, %v887
        %v932 = vpack.c.b16 %v890, %v888
        %v933 = vpack.c.b16 %v893, %v891
        %v934 = vpack.c.b16 %v894, %v892
        %v935 = vpack.c.b16 %v897, %v895
        %v936 = vpack.c.b16 %v898, %v896
        %v937 = vpack.c.b16 %v901, %v899
        %v938 = vpack.c.b16 %v902, %v900
        %v939 = vpack.c.b16 %v905, %v903
        %v940 = vpack.c.b16 %v906, %v904
        %v941 = vpack.c.b16 %v909, %v907
        %v942 = vpack.c.b16 %v910, %v908
        %975 = vmatpush.bf16.xpose.msra.mxu0 %v925
        %976 = vmatpush.bf16.xpose.msra.mxu0 %v923
        %977 = vmatpush.bf16.xpose.msra.mxu0 %v921
        %978 = vmatpush.bf16.xpose.msra.mxu0 %v919
        %979 = vmatpush.bf16.xpose.msra.mxu0 %v917
        %980 = vmatpush.bf16.xpose.msra.mxu0 %v915
        %981 = vmatpush.bf16.xpose.msra.mxu0 %v913
        %982 = vmatpush.bf16.xpose.msra.mxu0 %v911
        %983 = vmatmul.bf16.gmra.mxu0 %v779
        %v984 = vpop.f32.mrf.mxu0
        %v985 = vadd.f32 %v601, %v984
        %v986 = vpop.f32.mrf.mxu0
        %v987 = vadd.f32 %v604, %v986
        %988 = vmatmul.bf16.gmra.mxu0 %v781
        %v989 = vpop.f32.mrf.mxu0
        %v990 = vadd.f32 %v607, %v989
        %v991 = vpop.f32.mrf.mxu0
        %v992 = vadd.f32 %v610, %v991
        %993 = vmatmul.bf16.gmra.mxu0 %v783
        %v994 = vpop.f32.mrf.mxu0
        %v995 = vadd.f32 %v613, %v994
        %v996 = vpop.f32.mrf.mxu0
        %v997 = vadd.f32 %v616, %v996
        %998 = vmatmul.bf16.gmra.mxu0 %v785
        %v999 = vpop.f32.mrf.mxu0
        %v1000 = vadd.f32 %v619, %v999
        %v1001 = vpop.f32.mrf.mxu0
        %v1002 = vadd.f32 %v622, %v1001
        %1003 = vmatmul.bf16.gmra.mxu0 %v787
        %v1004 = vpop.f32.mrf.mxu0
        %v1005 = vadd.f32 %v625, %v1004
        %v1006 = vpop.f32.mrf.mxu0
        %v1007 = vadd.f32 %v628, %v1006
        %1008 = vmatmul.bf16.gmra.mxu0 %v789
        %v1009 = vpop.f32.mrf.mxu0
        %v1010 = vadd.f32 %v631, %v1009
        %v1011 = vpop.f32.mrf.mxu0
        %v1012 = vadd.f32 %v634, %v1011
        %1013 = vmatmul.bf16.gmra.mxu0 %v791
        %v1014 = vpop.f32.mrf.mxu0
        %v1015 = vadd.f32 %v637, %v1014
        %v1016 = vpop.f32.mrf.mxu0
        %v1017 = vadd.f32 %v640, %v1016
        %1018 = vmatmul.bf16.gmra.mxu0 %v793
        %v1019 = vpop.f32.mrf.mxu0
        %v1020 = vadd.f32 %v643, %v1019
        %v1021 = vpop.f32.mrf.mxu0
        %v1022 = vadd.f32 %v646, %v1021
        %1023 = vmatmul.bf16.gmra.mxu0 %v795
        %v1024 = vpop.f32.mrf.mxu0
        %v1025 = vadd.f32 %v649, %v1024
        %v1026 = vpop.f32.mrf.mxu0
        %v1027 = vadd.f32 %v652, %v1026
        %1028 = vdwg.mxu0
        %1029 = vmatpush.bf16.xpose.msra.mxu0 %v926
        %1030 = vmatpush.bf16.xpose.msra.mxu0 %v924
        %1031 = vmatpush.bf16.xpose.msra.mxu0 %v922
        %1032 = vmatpush.bf16.xpose.msra.mxu0 %v920
        %1033 = vmatpush.bf16.xpose.msra.mxu0 %v918
        %1034 = vmatpush.bf16.xpose.msra.mxu0 %v916
        %1035 = vmatpush.bf16.xpose.msra.mxu0 %v914
        %1036 = vmatpush.bf16.xpose.msra.mxu0 %v912
        %1037 = vmatmul.bf16.gmra.mxu0 %v780
        %v1038 = vpop.f32.mrf.mxu0
        %v1039 = vadd.f32 %v985, %v1038
        %v1040 = vpop.f32.mrf.mxu0
        %v1041 = vadd.f32 %v987, %v1040
        %1042 = vmatmul.bf16.gmra.mxu0 %v782
        %v1043 = vpop.f32.mrf.mxu0
        %v1044 = vadd.f32 %v990, %v1043
        %v1045 = vpop.f32.mrf.mxu0
        %v1046 = vadd.f32 %v992, %v1045
        %1047 = vmatmul.bf16.gmra.mxu0 %v784
        %v1048 = vpop.f32.mrf.mxu0
        %v1049 = vadd.f32 %v995, %v1048
        %v1050 = vpop.f32.mrf.mxu0
        %v1051 = vadd.f32 %v997, %v1050
        %1052 = vmatmul.bf16.gmra.mxu0 %v786
        %v1053 = vpop.f32.mrf.mxu0
        %v1054 = vadd.f32 %v1000, %v1053
        %v1055 = vpop.f32.mrf.mxu0
        %v1056 = vadd.f32 %v1002, %v1055
        %1057 = vmatmul.bf16.gmra.mxu0 %v788
        %v1058 = vpop.f32.mrf.mxu0
        %v1059 = vadd.f32 %v1005, %v1058
        %v1060 = vpop.f32.mrf.mxu0
        %v1061 = vadd.f32 %v1007, %v1060
        %1062 = vmatmul.bf16.gmra.mxu0 %v790
        %v1063 = vpop.f32.mrf.mxu0
        %v1064 = vadd.f32 %v1010, %v1063
        %v1065 = vpop.f32.mrf.mxu0
        %v1066 = vadd.f32 %v1012, %v1065
        %1067 = vmatmul.bf16.gmra.mxu0 %v792
        %v1068 = vpop.f32.mrf.mxu0
        %v1069 = vadd.f32 %v1015, %v1068
        %v1070 = vpop.f32.mrf.mxu0
        %v1071 = vadd.f32 %v1017, %v1070
        %1072 = vmatmul.bf16.gmra.mxu0 %v794
        %v1073 = vpop.f32.mrf.mxu0
        %v1074 = vadd.f32 %v1020, %v1073
        %v1075 = vpop.f32.mrf.mxu0
        %v1076 = vadd.f32 %v1022, %v1075
        %1077 = vmatmul.bf16.gmra.mxu0 %v796
        %v1078 = vpop.f32.mrf.mxu0
        %v1079 = vadd.f32 %v1025, %v1078
        %v1080 = vpop.f32.mrf.mxu0
        %v1081 = vadd.f32 %v1027, %v1080
        %1082 = vdwg.mxu0
        %1083 = vmatpush.bf16.xpose.msra.mxu0 %v941
        %1084 = vmatpush.bf16.xpose.msra.mxu0 %v939
        %1085 = vmatpush.bf16.xpose.msra.mxu0 %v937
        %1086 = vmatpush.bf16.xpose.msra.mxu0 %v935
        %1087 = vmatpush.bf16.xpose.msra.mxu0 %v933
        %1088 = vmatpush.bf16.xpose.msra.mxu0 %v931
        %1089 = vmatpush.bf16.xpose.msra.mxu0 %v929
        %1090 = vmatpush.bf16.xpose.msra.mxu0 %v927
        %1091 = vmatmul.bf16.gmra.mxu0 %v779
        %v1092 = vpop.f32.mrf.mxu0
        %v1093 = vadd.f32 %v672, %v1092
        %v1094 = vpop.f32.mrf.mxu0
        %v1095 = vadd.f32 %v675, %v1094
        %1096 = vmatmul.bf16.gmra.mxu0 %v781
        %v1097 = vpop.f32.mrf.mxu0
        %v1098 = vadd.f32 %v678, %v1097
        %v1099 = vpop.f32.mrf.mxu0
        %v1100 = vadd.f32 %v681, %v1099
        %1101 = vmatmul.bf16.gmra.mxu0 %v783
        %v1102 = vpop.f32.mrf.mxu0
        %v1103 = vadd.f32 %v684, %v1102
        %v1104 = vpop.f32.mrf.mxu0
        %v1105 = vadd.f32 %v687, %v1104
        %1106 = vmatmul.bf16.gmra.mxu0 %v785
        %v1107 = vpop.f32.mrf.mxu0
        %v1108 = vadd.f32 %v690, %v1107
        %v1109 = vpop.f32.mrf.mxu0
        %v1110 = vadd.f32 %v693, %v1109
        %1111 = vmatmul.bf16.gmra.mxu0 %v787
        %v1112 = vpop.f32.mrf.mxu0
        %v1113 = vadd.f32 %v696, %v1112
        %v1114 = vpop.f32.mrf.mxu0
        %v1115 = vadd.f32 %v699, %v1114
        %1116 = vmatmul.bf16.gmra.mxu0 %v789
        %v1117 = vpop.f32.mrf.mxu0
        %v1118 = vadd.f32 %v702, %v1117
        %v1119 = vpop.f32.mrf.mxu0
        %v1120 = vadd.f32 %v705, %v1119
        %1121 = vmatmul.bf16.gmra.mxu0 %v791
        %v1122 = vpop.f32.mrf.mxu0
        %v1123 = vadd.f32 %v708, %v1122
        %v1124 = vpop.f32.mrf.mxu0
        %v1125 = vadd.f32 %v711, %v1124
        %1126 = vmatmul.bf16.gmra.mxu0 %v793
        %v1127 = vpop.f32.mrf.mxu0
        %v1128 = vadd.f32 %v714, %v1127
        %v1129 = vpop.f32.mrf.mxu0
        %v1130 = vadd.f32 %v717, %v1129
        %1131 = vmatmul.bf16.gmra.mxu0 %v795
        %v1132 = vpop.f32.mrf.mxu0
        %v1133 = vadd.f32 %v720, %v1132
        %v1134 = vpop.f32.mrf.mxu0
        %v1135 = vadd.f32 %v723, %v1134
        %1136 = vdwg.mxu0
        %1137 = vmatpush.bf16.xpose.msra.mxu0 %v942
        %1138 = vmatpush.bf16.xpose.msra.mxu0 %v940
        %1139 = vmatpush.bf16.xpose.msra.mxu0 %v938
        %1140 = vmatpush.bf16.xpose.msra.mxu0 %v936
        %1141 = vmatpush.bf16.xpose.msra.mxu0 %v934
        %1142 = vmatpush.bf16.xpose.msra.mxu0 %v932
        %1143 = vmatpush.bf16.xpose.msra.mxu0 %v930
        %1144 = vmatpush.bf16.xpose.msra.mxu0 %v928
        %1145 = vmatmul.bf16.gmra.mxu0 %v780
        %v1146 = vpop.f32.mrf.mxu0
        %v1147 = vadd.f32 %v1093, %v1146
        %v1148 = vpop.f32.mrf.mxu0
        %v1149 = vadd.f32 %v1095, %v1148
        %1150 = vmatmul.bf16.gmra.mxu0 %v782
        %v1151 = vpop.f32.mrf.mxu0
        %v1152 = vadd.f32 %v1098, %v1151
        %v1153 = vpop.f32.mrf.mxu0
        %v1154 = vadd.f32 %v1100, %v1153
        %1155 = vmatmul.bf16.gmra.mxu0 %v784
        %v1156 = vpop.f32.mrf.mxu0
        %v1157 = vadd.f32 %v1103, %v1156
        %v1158 = vpop.f32.mrf.mxu0
        %v1159 = vadd.f32 %v1105, %v1158
        %1160 = vmatmul.bf16.gmra.mxu0 %v786
        %v1161 = vpop.f32.mrf.mxu0
        %v1162 = vadd.f32 %v1108, %v1161
        %v1163 = vpop.f32.mrf.mxu0
        %v1164 = vadd.f32 %v1110, %v1163
        %1165 = vmatmul.bf16.gmra.mxu0 %v788
        %v1166 = vpop.f32.mrf.mxu0
        %v1167 = vadd.f32 %v1113, %v1166
        %v1168 = vpop.f32.mrf.mxu0
        %v1169 = vadd.f32 %v1115, %v1168
        %1170 = vmatmul.bf16.gmra.mxu0 %v790
        %v1171 = vpop.f32.mrf.mxu0
        %v1172 = vadd.f32 %v1118, %v1171
        %v1173 = vpop.f32.mrf.mxu0
        %v1174 = vadd.f32 %v1120, %v1173
        %1175 = vmatmul.bf16.gmra.mxu0 %v792
        %v1176 = vpop.f32.mrf.mxu0
        %v1177 = vadd.f32 %v1123, %v1176
        %v1178 = vpop.f32.mrf.mxu0
        %v1179 = vadd.f32 %v1125, %v1178
        %1180 = vmatmul.bf16.gmra.mxu0 %v794
        %v1181 = vpop.f32.mrf.mxu0
        %v1182 = vadd.f32 %v1128, %v1181
        %v1183 = vpop.f32.mrf.mxu0
        %v1184 = vadd.f32 %v1130, %v1183
        %1185 = vmatmul.bf16.gmra.mxu0 %v796
        %v1186 = vpop.f32.mrf.mxu0
        %v1187 = vadd.f32 %v1133, %v1186
        %v1188 = vpop.f32.mrf.mxu0
        %v1189 = vadd.f32 %v1135, %v1188
        %1190 = vdwg.mxu0
        %v1191 = vld [vmem:[%s316] sm:$0x3]
        %v1193 = vperm.slane %v1191, 0
        %v1194 = vperm.slane %v1191, 1
        %v1197 = vadd.f32 %v1039, %v1193
        %v1198 = vadd.f32 %v1147, %v1194
        %v1199 = vadd.f32 %v1041, %v1193
        %v1200 = vadd.f32 %v1149, %v1194
        %v1201 = vadd.f32 %v1044, %v1193
        %v1202 = vadd.f32 %v1152, %v1194
        %v1203 = vadd.f32 %v1046, %v1193
        %v1204 = vadd.f32 %v1154, %v1194
        %v1205 = vadd.f32 %v1049, %v1193
        %v1206 = vadd.f32 %v1157, %v1194
        %v1207 = vadd.f32 %v1051, %v1193
        %v1208 = vadd.f32 %v1159, %v1194
        %v1209 = vadd.f32 %v1054, %v1193
        %v1210 = vadd.f32 %v1162, %v1194
        %v1211 = vadd.f32 %v1056, %v1193
        %v1212 = vadd.f32 %v1164, %v1194
        %v1213 = vadd.f32 %v1059, %v1193
        %v1214 = vadd.f32 %v1167, %v1194
        %v1215 = vadd.f32 %v1061, %v1193
        %v1216 = vadd.f32 %v1169, %v1194
        %v1217 = vadd.f32 %v1064, %v1193
        %v1218 = vadd.f32 %v1172, %v1194
        %v1219 = vadd.f32 %v1066, %v1193
        %v1220 = vadd.f32 %v1174, %v1194
        %v1221 = vadd.f32 %v1069, %v1193
        %v1222 = vadd.f32 %v1177, %v1194
        %v1223 = vadd.f32 %v1071, %v1193
        %v1224 = vadd.f32 %v1179, %v1194
        %v1225 = vadd.f32 %v1074, %v1193
        %v1226 = vadd.f32 %v1182, %v1194
        %v1227 = vadd.f32 %v1076, %v1193
        %v1228 = vadd.f32 %v1184, %v1194
        %v1229 = vadd.f32 %v1079, %v1193
        %v1230 = vadd.f32 %v1187, %v1194
        %v1231 = vadd.f32 %v1081, %v1193
        %v1232 = vadd.f32 %v1189, %v1194
        %1233 = vst [vmem:[%s298] sm:$0xff] %v1197
        %1234 = vst [vmem:[%s298 + $0x8] sm:$0xff] %v1198
        %1235 = vst [vmem:[%s298 + $0x10] sm:$0xff] %v1199
        %1236 = vst [vmem:[%s298 + $0x18] sm:$0xff] %v1200
        %1237 = vst [vmem:[%s298 + $0x20] sm:$0xff] %v1201
        %1238 = vst [vmem:[%s298 + $0x28] sm:$0xff] %v1202
        %1239 = vst [vmem:[%s298 + $0x30] sm:$0xff] %v1203
        %1240 = vst [vmem:[%s298 + $0x38] sm:$0xff] %v1204
        %1241 = vst [vmem:[%s298 + $0x40] sm:$0xff] %v1205
        %1242 = vst [vmem:[%s298 + $0x48] sm:$0xff] %v1206
        %1243 = vst [vmem:[%s298 + $0x50] sm:$0xff] %v1207
        %1244 = vst [vmem:[%s298 + $0x58] sm:$0xff] %v1208
        %1245 = vst [vmem:[%s298 + $0x60] sm:$0xff] %v1209
        %1246 = vst [vmem:[%s298 + $0x68] sm:$0xff] %v1210
        %1247 = vst [vmem:[%s298 + $0x70] sm:$0xff] %v1211
        %1248 = vst [vmem:[%s298 + $0x78] sm:$0xff] %v1212
        %1249 = vst [vmem:[%s298 + $0x80] sm:$0xff] %v1213
        %1250 = vst [vmem:[%s298 + $0x88] sm:$0xff] %v1214
        %1251 = vst [vmem:[%s298 + $0x90] sm:$0xff] %v1215
        %1252 = vst [vmem:[%s298 + $0x98] sm:$0xff] %v1216
        %1253 = vst [vmem:[%s298 + $0xa0] sm:$0xff] %v1217
        %1254 = vst [vmem:[%s298 + $0xa8] sm:$0xff] %v1218
        %1255 = vst [vmem:[%s298 + $0xb0] sm:$0xff] %v1219
        %1256 = vst [vmem:[%s298 + $0xb8] sm:$0xff] %v1220
        %1257 = vst [vmem:[%s298 + $0xc0] sm:$0xff] %v1221
        %1258 = vst [vmem:[%s298 + $0xc8] sm:$0xff] %v1222
        %1259 = vst [vmem:[%s298 + $0xd0] sm:$0xff] %v1223
        %1260 = vst [vmem:[%s298 + $0xd8] sm:$0xff] %v1224
        %1261 = vst [vmem:[%s298 + $0xe0] sm:$0xff] %v1225
        %1262 = vst [vmem:[%s298 + $0xe8] sm:$0xff] %v1226
        %1263 = vst [vmem:[%s298 + $0xf0] sm:$0xff] %v1227
        %1264 = vst [vmem:[%s298 + $0xf8] sm:$0xff] %v1228
        %1265 = vst [vmem:[%s298 + $0x100] sm:$0xff] %v1229
        %1266 = vst [vmem:[%s298 + $0x108] sm:$0xff] %v1230
        %1267 = vst [vmem:[%s298 + $0x110] sm:$0xff] %v1231
        %1268 = vst [vmem:[%s298 + $0x118] sm:$0xff] %v1232
        %s1269 = sand.u32 %s171, 1
        %s1270 = scalar_lea.sflag [#allocation3], %s1269
        %s1271 = sand.u32 %s171, 1
        %s1272 = smul.addr %s1271, 288
        %s1273 = scalar_lea.vmem [#allocation2], %s1272
        // Predicated region
        $region41: #{tpu_custom_call.1} parent=39 // pred_check
          %p1274 = pneg %p181
        $region42: #{tpu_custom_call.1} parent=39 // pred_check_branch
          %1276 = sbr.rel (%p1274) target = $region44
        $region43: #{tpu_custom_call.1} parent=39 // pred_region
          %s1277 = smul.u32 18, %s23
          %s1278 = smul.u32 2, %s24
          %1280 = vsyncadd %s1270, 0
          %s1281 = smul.addr %s1277, 4
          %s1282 = sadd.s32 %s1278, %s1281
          %s1283 = smul.addr %s1282, 8
          %s1284 = scalar_lea.hbm %s5, %s1283
          %s1285 = sshll.u32 %s1273, 4
          %s1286 = int_to_ptr.vmem [resolvable:$true] %s1285
          %s1287 = sshll.u32 %s1284, 4
          %s1288 = int_to_ptr.hbm [resolvable:$true] %s1287
          %1293 = dma.vmem_to_hbm [thread:$0]  %s1286, 4608, %s1288, %s1270, 256, 512, 16
        $region44: #{tpu_custom_call.1} parent=39 // pred_fallthru
          _
      $region40: #{tpu_custom_call.1} parent=5 // pred_fallthru
        _
      %p1294 = scmp.le.s32.totalorder 2, %s14
      // Predicated region
      $region45: #{tpu_custom_call.1} parent=5 // pred_check
        %p1295 = pneg %p1294
      $region46: #{tpu_custom_call.1} parent=5 // pred_check_branch
        %1297 = sbr.rel (%p1295) target = $region48
      $region47: #{tpu_custom_call.1} parent=5 // pred_region
        %s1298 = ssub.s32 %s14, 2
        // Predicated region
        $region49: #{tpu_custom_call.1} parent=47 // pred_check
          %p1299 = pneg %p187
        $region50: #{tpu_custom_call.1} parent=47 // pred_check_branch
          %1301 = sbr.rel (%p1299) target = $region52
        $region51: #{tpu_custom_call.1} parent=47 // pred_region
          %s1302 = sand.u32 %s172, 1
          %s1303 = scalar_lea.sflag [#allocation3], %s1302
          %s1304 = sand.u32 %s172, 1
          %s1305 = smul.addr %s1304, 288
          %s1306 = scalar_lea.vmem [#allocation2], %s1305
          %1308 = dma.done %s1303, 4608
        $region52: #{tpu_custom_call.1} parent=47 // pred_fallthru
          _
      $region48: #{tpu_custom_call.1} parent=5 // pred_fallthru
        _
    $region6: #{tpu_custom_call.1} parent=1 // loop_footer
      %s18 = sadd.s32 1, %s14
    $region7: #{tpu_custom_call.1} parent=1 // loop_footer_branch
      %13 = sbr.rel target = $region3
    $region8: #{tpu_custom_call.1} parent=1 // loop_exit
      _
    %1309 = vsyncpa [#allocation3], 1
    %s1310 = scalar_lea.sflag [#allocation3], 1
    %1311 = vsyncpa %s1310, 1

</llo_original>
